<compile_context>
chip_gen: v7x
topology: tpu7x:2x2x1
jax: 0.10.0
libtpu: 0.0.40
codegen_flags: <defaults>
</compile_context>

<pallas_src>
import functools

import jax
import jax.numpy as jnp
from jax.experimental import pallas as pl
from jax.experimental.pallas import tpu as pltpu

IN_CHANNELS = 9
CHANNELS = 18
KERNEL_SIZE = 2
STRIDE = 2
EPS = 1e-6


def _downsample_kernel(x_ref, w_ref, bias_ref, gamma_ref, beta_ref, o_ref, *,
                       c_in, n_taps):
    """Lane-dense blocks (batch dim squeezed out by the BlockSpec):
         x_ref:     (K*C_in, TILE_L)  row k*C_in+ci, col lo  == x[b, ci, lo*K + k]
         w_ref:     (C_out, K*C_in)   W2[co, k*C_in+ci]      == torch_W[co, ci, k]
         bias_ref:  (C_out, 1)
         gamma_ref: (C_in, 1), beta_ref: (C_in, 1)
         o_ref:     (C_out, TILE_L)
    """
    x = x_ref[...].astype(jnp.float32)          # (K*C_in, T)
    w = w_ref[...].astype(jnp.float32)          # (C_out, K*C_in)   hoisted
    gamma = gamma_ref[...].astype(jnp.float32)  # (C_in, 1)         hoisted
    beta = beta_ref[...].astype(jnp.float32)    # (C_in, 1)         hoisted

    acc = jnp.zeros(o_ref.shape, dtype=jnp.float32)      # (C_out, T)

    # Unrolled over the K conv taps.  Tap k is the contiguous sublane block of C_in
    # rows; channels-first LayerNorm == reduction over those C_in rows per column.
    for k in range(n_taps):
        xk = x[k * c_in:(k + 1) * c_in, :]                 # (C_in, T)
        mu = jnp.mean(xk, axis=0, keepdims=True)           # (1, T)
        cen = xk - mu
        var = jnp.mean(cen * cen, axis=0, keepdims=True)   # (1, T)
        xn = cen * jax.lax.rsqrt(var + EPS) * gamma + beta # (C_in, T)
        wk = w[:, k * c_in:(k + 1) * c_in]                 # (C_out, C_in)
        acc = acc + jnp.dot(wk, xn, preferred_element_type=jnp.float32)

    o_ref[...] = (acc + bias_ref[...].astype(jnp.float32)).astype(o_ref.dtype)


def _pick_tile(l_out):
    """Largest lane tile (multiple of 128, up to 8192) dividing L_out; else full L_out."""
    for t in (8192, 4096, 2048, 1024, 512, 256, 128):
        if l_out % t == 0:
            return t
    return l_out


def downsample_forward(x_ncl, conv_w, conv_b, ln_gamma, ln_beta):
    """x_ncl: (B, C_in, L) float32 (PyTorch NCL layout)
       conv_w: (C_out, C_in, K), conv_b: (C_out,)
       ln_gamma/ln_beta: (C_in,)
       returns (B, C_out, L_out) matching nn.Conv1d(stride=STRIDE, no padding)."""
    B, C_in, L = x_ncl.shape
    C_out, _, K = conv_w.shape
    S = STRIDE
    assert K == S and L % S == 0, "kernel implements non-overlapping (K == stride) conv"
    L_out = L // S

    tile_l = _pick_tile(L_out)
    grid = (B, L_out // tile_l)

    # Single input relayout: fold the K taps into channel rows, keep L_out on lanes.
    #   x_f[b, k*C_in + ci, lo] = x[b, ci, lo*K + k]
    x_f = jnp.transpose(x_ncl.reshape(B, C_in, L_out, K), (0, 3, 1, 2))
    x_f = x_f.reshape(B, K * C_in, L_out)
    # Weight reorder to match the folded rows:  W2[co, k*C_in + ci] = W[co, ci, k]
    w2 = jnp.transpose(conv_w, (0, 2, 1)).reshape(C_out, K * C_in)
    b2 = conv_b.reshape(C_out, 1)
    g2 = ln_gamma.reshape(C_in, 1)
    be2 = ln_beta.reshape(C_in, 1)

    out = pl.pallas_call(
        functools.partial(_downsample_kernel, c_in=C_in, n_taps=K),
        out_shape=jax.ShapeDtypeStruct((B, C_out, L_out), jnp.float32),
        grid=grid,
        in_specs=[
            # Activations: tiled along L_out (lane-dense), batch dim squeezed.
            pl.BlockSpec((None, K * C_in, tile_l), lambda b, j: (b, 0, j)),
            # Parameters: single tiny blocks, constant index_map -> DMA'd once.
            pl.BlockSpec((C_out, K * C_in), lambda b, j: (0, 0)),
            pl.BlockSpec((C_out, 1), lambda b, j: (0, 0)),
            pl.BlockSpec((C_in, 1), lambda b, j: (0, 0)),
            pl.BlockSpec((C_in, 1), lambda b, j: (0, 0)),
        ],
        out_specs=pl.BlockSpec((None, C_out, tile_l), lambda b, j: (b, 0, j)),
        compiler_params=pltpu.CompilerParams(
            dimension_semantics=("parallel", "parallel")),
    )(x_f, w2, b2, g2, be2)

    return out


def _reference(x_ncl, conv_w, conv_b, ln_gamma, ln_beta):
    """Plain-JAX reference mirroring the PyTorch module."""
    u = x_ncl.mean(axis=1, keepdims=True)
    s = ((x_ncl - u) ** 2).mean(axis=1, keepdims=True)
    xn = (x_ncl - u) / jnp.sqrt(s + EPS)
    xn = ln_gamma[None, :, None] * xn + ln_beta[None, :, None]
    y = jax.lax.conv_general_dilated(
        xn, conv_w, window_strides=(STRIDE,), padding="VALID",
        dimension_numbers=("NCH", "OIH", "NCH"))
    return y + conv_b[None, :, None]


if __name__ == "__main__":
    key = jax.random.PRNGKey(0)
    kx, kw, kb = jax.random.split(key, 3)

    B, L = 2, 16
    x = jax.random.normal(kx, (B, IN_CHANNELS, L), dtype=jnp.float32)

    # Deterministic parameter init (shapes from the module's __init__).
    fan_in = IN_CHANNELS * KERNEL_SIZE
    conv_w = jax.random.normal(kw, (CHANNELS, IN_CHANNELS, KERNEL_SIZE),
                               dtype=jnp.float32) * (1.0 / jnp.sqrt(fan_in))
    conv_b = jax.random.normal(kb, (CHANNELS,), dtype=jnp.float32) * 0.01
    ln_gamma = jnp.ones((IN_CHANNELS,), dtype=jnp.float32)   # LayerNorm init: ones
    ln_beta = jnp.zeros((IN_CHANNELS,), dtype=jnp.float32)   # LayerNorm init: zeros

    out = downsample_forward(x, conv_w, conv_b, ln_gamma, ln_beta)
    out = jax.block_until_ready(out)

    ref = _reference(x, conv_w, conv_b, ln_gamma, ln_beta)
    assert out.shape == (B, CHANNELS, L // STRIDE), out.shape
    assert jnp.allclose(out, ref, atol=1e-4, rtol=1e-4), \
        float(jnp.max(jnp.abs(out - ref)))

    print("KERNEL_OK")
</pallas_src>

<mosaic_0001>
module attributes {stable_mosaic.version = 11 : i64} {
  func.func @_downsample_kernel(%arg0: i32, %arg1: i32, %arg2: memref<1x18x8xf32, #tpu.memory_space<vmem>>, %arg3: memref<18x18xf32, #tpu.memory_space<vmem>>, %arg4: memref<18x1xf32, #tpu.memory_space<vmem>>, %arg5: memref<9x1xf32, #tpu.memory_space<vmem>>, %arg6: memref<9x1xf32, #tpu.memory_space<vmem>>, %arg7: memref<1x18x8xf32, #tpu.memory_space<vmem>>) attributes {dimension_semantics = [#tpu.dimension_semantics<parallel>, #tpu.dimension_semantics<parallel>], iteration_bounds = array<i64: 2, 1>, scalar_prefetch = 0 : i64, scratch_operands = 0 : i64, tpu.core_type = #tpu.core_type<tc>, window_params = [{transform_indices = @transform_0, window_bounds = array<i64: 1, 18, 8>}, {pipeline_mode = #tpu.pipeline_mode<synchronous>, transform_indices = @transform_1, window_bounds = array<i64: 18, 18>}, {pipeline_mode = #tpu.pipeline_mode<synchronous>, transform_indices = @transform_2, window_bounds = array<i64: 18, 1>}, {pipeline_mode = #tpu.pipeline_mode<synchronous>, transform_indices = @transform_3, window_bounds = array<i64: 9, 1>}, {pipeline_mode = #tpu.pipeline_mode<synchronous>, transform_indices = @transform_4, window_bounds = array<i64: 9, 1>}, {transform_indices = @transform_5, window_bounds = array<i64: 1, 18, 8>}]} {
    %c0 = arith.constant 0 : index
    %c0_0 = arith.constant 0 : index
    %c0_1 = arith.constant 0 : index
    %0 = vector.load %arg2[%c0, %c0_0, %c0_1] : memref<1x18x8xf32, #tpu.memory_space<vmem>>, vector<1x18x8xf32>
    %1 = vector.shape_cast %0 : vector<1x18x8xf32> to vector<18x8xf32>
    %c0_2 = arith.constant 0 : index
    %c0_3 = arith.constant 0 : index
    %2 = vector.load %arg3[%c0_2, %c0_3] : memref<18x18xf32, #tpu.memory_space<vmem>>, vector<18x18xf32>
    %c0_4 = arith.constant 0 : index
    %c0_5 = arith.constant 0 : index
    %3 = vector.load %arg5[%c0_4, %c0_5] : memref<9x1xf32, #tpu.memory_space<vmem>>, vector<9x1xf32>
    %c0_6 = arith.constant 0 : index
    %c0_7 = arith.constant 0 : index
    %4 = vector.load %arg6[%c0_6, %c0_7] : memref<9x1xf32, #tpu.memory_space<vmem>>, vector<9x1xf32>
    %cst = arith.constant 0.000000e+00 : f32
    %5 = vector.broadcast %cst : f32 to vector<18x8xf32>
    %6 = vector.extract_strided_slice %1 {offsets = [0, 0], sizes = [9, 8], strides = [1, 1]} : vector<18x8xf32> to vector<9x8xf32>
    %cst_8 = arith.constant dense<0.000000e+00> : vector<8xf32>
    %7 = vector.multi_reduction <add>, %6, %cst_8 [0] : vector<9x8xf32> to vector<8xf32>
    %8 = vector.shape_cast %7 : vector<8xf32> to vector<1x8xf32>
    %cst_9 = arith.constant 9.000000e+00 : f32
    %9 = vector.broadcast %cst_9 : f32 to vector<1x8xf32>
    %10 = arith.divf %8, %9 : vector<1x8xf32>
    %11 = vector.broadcast %10 : vector<1x8xf32> to vector<9x8xf32>
    %12 = arith.subf %6, %11 : vector<9x8xf32>
    %13 = arith.mulf %12, %12 : vector<9x8xf32>
    %cst_10 = arith.constant dense<0.000000e+00> : vector<8xf32>
    %14 = vector.multi_reduction <add>, %13, %cst_10 [0] : vector<9x8xf32> to vector<8xf32>
    %15 = vector.shape_cast %14 : vector<8xf32> to vector<1x8xf32>
    %cst_11 = arith.constant 9.000000e+00 : f32
    %16 = vector.broadcast %cst_11 : f32 to vector<1x8xf32>
    %17 = arith.divf %15, %16 : vector<1x8xf32>
    %cst_12 = arith.constant 9.99999997E-7 : f32
    %18 = vector.broadcast %cst_12 : f32 to vector<1x8xf32>
    %19 = arith.addf %17, %18 : vector<1x8xf32>
    %20 = math.rsqrt %19 : vector<1x8xf32>
    %21 = vector.broadcast %20 : vector<1x8xf32> to vector<9x8xf32>
    %22 = arith.mulf %12, %21 : vector<9x8xf32>
    %23 = vector.broadcast %3 : vector<9x1xf32> to vector<9x8xf32>
    %24 = arith.mulf %22, %23 : vector<9x8xf32>
    %25 = vector.broadcast %4 : vector<9x1xf32> to vector<9x8xf32>
    %26 = arith.addf %24, %25 : vector<9x8xf32>
    %27 = vector.extract_strided_slice %2 {offsets = [0, 0], sizes = [18, 9], strides = [1, 1]} : vector<18x18xf32> to vector<18x9xf32>
    %cst_13 = arith.constant dense<0.000000e+00> : vector<18x8xf32>
    %28 = tpu.matmul %27, %26, %cst_13 {dimension_numbers = #tpu.dot_dimension_numbers<[1], [0], [0], [1], [0, 0, 1, 1], [], []>} : vector<18x9xf32>, vector<9x8xf32>, vector<18x8xf32> -> vector<18x8xf32>
    %29 = arith.addf %5, %28 : vector<18x8xf32>
    %30 = vector.extract_strided_slice %1 {offsets = [9, 0], sizes = [9, 8], strides = [1, 1]} : vector<18x8xf32> to vector<9x8xf32>
    %cst_14 = arith.constant dense<0.000000e+00> : vector<8xf32>
    %31 = vector.multi_reduction <add>, %30, %cst_14 [0] : vector<9x8xf32> to vector<8xf32>
    %32 = vector.shape_cast %31 : vector<8xf32> to vector<1x8xf32>
    %cst_15 = arith.constant 9.000000e+00 : f32
    %33 = vector.broadcast %cst_15 : f32 to vector<1x8xf32>
    %34 = arith.divf %32, %33 : vector<1x8xf32>
    %35 = vector.broadcast %34 : vector<1x8xf32> to vector<9x8xf32>
    %36 = arith.subf %30, %35 : vector<9x8xf32>
    %37 = arith.mulf %36, %36 : vector<9x8xf32>
    %cst_16 = arith.constant dense<0.000000e+00> : vector<8xf32>
    %38 = vector.multi_reduction <add>, %37, %cst_16 [0] : vector<9x8xf32> to vector<8xf32>
    %39 = vector.shape_cast %38 : vector<8xf32> to vector<1x8xf32>
    %cst_17 = arith.constant 9.000000e+00 : f32
    %40 = vector.broadcast %cst_17 : f32 to vector<1x8xf32>
    %41 = arith.divf %39, %40 : vector<1x8xf32>
    %cst_18 = arith.constant 9.99999997E-7 : f32
    %42 = vector.broadcast %cst_18 : f32 to vector<1x8xf32>
    %43 = arith.addf %41, %42 : vector<1x8xf32>
    %44 = math.rsqrt %43 : vector<1x8xf32>
    %45 = vector.broadcast %44 : vector<1x8xf32> to vector<9x8xf32>
    %46 = arith.mulf %36, %45 : vector<9x8xf32>
    %47 = vector.broadcast %3 : vector<9x1xf32> to vector<9x8xf32>
    %48 = arith.mulf %46, %47 : vector<9x8xf32>
    %49 = vector.broadcast %4 : vector<9x1xf32> to vector<9x8xf32>
    %50 = arith.addf %48, %49 : vector<9x8xf32>
    %51 = vector.extract_strided_slice %2 {offsets = [0, 9], sizes = [18, 9], strides = [1, 1]} : vector<18x18xf32> to vector<18x9xf32>
    %cst_19 = arith.constant dense<0.000000e+00> : vector<18x8xf32>
    %52 = tpu.matmul %51, %50, %cst_19 {dimension_numbers = #tpu.dot_dimension_numbers<[1], [0], [0], [1], [0, 0, 1, 1], [], []>} : vector<18x9xf32>, vector<9x8xf32>, vector<18x8xf32> -> vector<18x8xf32>
    %53 = arith.addf %29, %52 : vector<18x8xf32>
    %c0_20 = arith.constant 0 : index
    %c0_21 = arith.constant 0 : index
    %54 = vector.load %arg4[%c0_20, %c0_21] : memref<18x1xf32, #tpu.memory_space<vmem>>, vector<18x1xf32>
    %55 = vector.broadcast %54 : vector<18x1xf32> to vector<18x8xf32>
    %56 = arith.addf %53, %55 : vector<18x8xf32>
    %c0_22 = arith.constant 0 : index
    %c0_23 = arith.constant 0 : index
    %c0_24 = arith.constant 0 : index
    %57 = vector.load %arg7[%c0_22, %c0_23, %c0_24] : memref<1x18x8xf32, #tpu.memory_space<vmem>>, vector<1x18x8xf32>
    %58 = vector.shape_cast %57 : vector<1x18x8xf32> to vector<18x8xf32>
    %59 = vector.shape_cast %56 : vector<18x8xf32> to vector<1x18x8xf32>
    tpu.vector_store %arg7[%c0_22, %c0_23, %c0_24], %59 {strides = array<i32>} : memref<1x18x8xf32, #tpu.memory_space<vmem>>, vector<1x18x8xf32>,
    return
  }
  func.func @transform_0(%arg0: i32, %arg1: i32) -> (i32, i32, i32) {
    %c0_i32 = arith.constant 0 : i32
    %c0_i32_0 = arith.constant 0 : i32
    return %arg0, %c0_i32, %arg1 : i32, i32, i32
  }
  func.func @transform_1(%arg0: i32, %arg1: i32) -> (i32, i32) {
    %c0_i32 = arith.constant 0 : i32
    %c0_i32_0 = arith.constant 0 : i32
    %c0_i32_1 = arith.constant 0 : i32
    return %c0_i32, %c0_i32_0 : i32, i32
  }
  func.func @transform_2(%arg0: i32, %arg1: i32) -> (i32, i32) {
    %c0_i32 = arith.constant 0 : i32
    %c0_i32_0 = arith.constant 0 : i32
    %c0_i32_1 = arith.constant 0 : i32
    return %c0_i32, %c0_i32_0 : i32, i32
  }
  func.func @transform_3(%arg0: i32, %arg1: i32) -> (i32, i32) {
    %c0_i32 = arith.constant 0 : i32
    %c0_i32_0 = arith.constant 0 : i32
    %c0_i32_1 = arith.constant 0 : i32
    return %c0_i32, %c0_i32_0 : i32, i32
  }
  func.func @transform_4(%arg0: i32, %arg1: i32) -> (i32, i32) {
    %c0_i32 = arith.constant 0 : i32
    %c0_i32_0 = arith.constant 0 : i32
    %c0_i32_1 = arith.constant 0 : i32
    return %c0_i32, %c0_i32_0 : i32, i32
  }
  func.func @transform_5(%arg0: i32, %arg1: i32) -> (i32, i32, i32) {
    %c0_i32 = arith.constant 0 : i32
    %c0_i32_0 = arith.constant 0 : i32
    return %arg0, %c0_i32, %arg1 : i32, i32, i32
  }
}

</mosaic_0001>

<llo_original>
// kernel: tpu_custom_call.1
$region0: #{tpu_custom_call.1}
  #allocation0 [shape = 'u32[]', space=smem, size = 0x4, offset = 0x4, fixed_abs, tag = 'smem constant byte address 0x4 - core index']
  #allocation1 [shape = 'u32[144,128]{1,0:T(1,128)}', space=vmem, size = 0x12000, scoped, tag = 'internal scratch']
  %s0 = inlined_call_operand.vmem [shape: f32[2,18,8], index: 0, kind: input, shape index: {}]
  %s1 = inlined_call_operand.vmem [shape: f32[18,18], index: 1, kind: input, shape index: {}]
  %s2 = inlined_call_operand.vmem [shape: f32[18,1], index: 2, kind: input, shape index: {}]
  %s3 = inlined_call_operand.vmem [shape: f32[9,1], index: 3, kind: input, shape index: {}]
  %s4 = inlined_call_operand.vmem [shape: f32[9,1], index: 4, kind: input, shape index: {}]
  %s5 = inlined_call_operand.vmem [shape: f32[2,18,8], index: 5, kind: output, shape index: {}]
  %s6 = sld [smem:[#allocation0]]
  $region53: #{tpu_custom_call.1} parent=0
    _
  %s8 = ssub.s32 1, %s6
  %s9 = scalar_select 0, %s8, %s6
  loop: start=0, step=1, limit=4
  $region2: #{tpu_custom_call.1} parent=0 // loop_pre_header
    _
  $region3: #{tpu_custom_call.1} parent=0 // loop_header
    %s11 = sphi 0, %s15
    %p12 = scmp.ge.s32.totalorder %s11, 4
    %s18 = sphi 0, %s30
    %s19 = sphi 0, %s26
    %s20 = sphi 0, %s18
    %s21 = sphi 0, %s19
    %s22 = sphi 0, %s20
    %s23 = sphi 0, %s21
    %s35 = sphi 0, %s37
    %s38 = sphi 0, %s35
    %s39 = sphi 0, %s38
    %s55 = sphi 0, %s39
    %s59 = sphi 0, %s59
    %s61 = sphi 0, %s59
    %s62 = sphi 0, %s61
    %s76 = sphi 0, %s62
    %s80 = sphi 0, %s80
    %s82 = sphi 0, %s80
    %s83 = sphi 0, %s82
    %s97 = sphi 0, %s83
    %s101 = sphi 0, %s101
    %s103 = sphi 0, %s101
    %s104 = sphi 0, %s103
    %s118 = sphi 0, %s104
    %s122 = sphi 0, %s122
    %s124 = sphi 0, %s122
    %s125 = sphi 0, %s124
    %s139 = sphi 0, %s125
    %s147 = sphi 0, %s149
    %s150 = sphi 0, %s147
    %s151 = sphi 0, %s150
    %s167 = sphi 0, %s151
  $region4: #{tpu_custom_call.1} parent=0 // loop_header_branch
    %14 = sbr.rel (%p12) target = $region8
  $region5: #{tpu_custom_call.1} parent=0 // loop_body
    %s16 = ssub.s32 %s11, 1
    %s17 = ssub.s32 %s11, 2
    %s24 = sadd.s32 1, %s19
    %p25 = scmp.ge.s32.totalorder %s24, 1
    %s26 = scalar_select %p25, 0, %s24
    %s27 = sadd.s32 1, %s18
    %s28 = scalar_select %p25, %s27, %s18
    %p29 = scmp.ge.s32.totalorder %s28, 2
    %s30 = scalar_select %p29, 0, %s28
    %s31 = ssub.s32 %s18, %s30
    %s32 = ssub.s32 %s19, %s26
    %s33 = sor.u32 %s31, %s32
    %p34 = scmp.eq.s32.totalorder %s33, 0
    %s36 = sadd.s32 %s35, 1
    %s37 = scalar_select %p34, %s35, %s36
    %p40 = pneg %p34
    %p41 = scmp.eq.s32.totalorder %s11, 1
    %p42 = por %p40, %p41
    %p43 = scmp.ne.s32.totalorder %s35, %s38
    %p44 = scmp.eq.s32.totalorder %s11, 0
    %p45 = por %p43, %p44
    %p46 = scmp.ne.s32.totalorder %s35, %s38
    %p47 = scmp.eq.s32.totalorder %s16, 1
    %p48 = por %p46, %p47
    %p49 = scmp.ne.s32.totalorder %s38, %s39
    %p50 = scmp.eq.s32.totalorder %s16, 0
    %p51 = por %p49, %p50
    %p52 = scmp.ne.s32.totalorder %s38, %s39
    %p53 = scmp.eq.s32.totalorder %s17, 1
    %p54 = por %p52, %p53
    %p56 = scmp.ne.s32.totalorder %s39, %s55
    %p57 = scmp.eq.s32.totalorder %s17, 0
    %p58 = por %p56, %p57
    %s60 = sadd.s32 %s59, 1
    %p63 = scmp.eq.s32.totalorder %s11, 1
    %p64 = scmp.ne.s32.totalorder %s59, %s61
    %p65 = scmp.eq.s32.totalorder %s11, 0
    %p66 = por %p64, %p65
    %p67 = scmp.ne.s32.totalorder %s59, %s61
    %p68 = scmp.eq.s32.totalorder %s16, 1
    %p69 = por %p67, %p68
    %p70 = scmp.ne.s32.totalorder %s61, %s62
    %p71 = scmp.eq.s32.totalorder %s16, 0
    %p72 = por %p70, %p71
    %p73 = scmp.ne.s32.totalorder %s61, %s62
    %p74 = scmp.eq.s32.totalorder %s17, 1
    %p75 = por %p73, %p74
    %p77 = scmp.ne.s32.totalorder %s62, %s76
    %p78 = scmp.eq.s32.totalorder %s17, 0
    %p79 = por %p77, %p78
    %s81 = sadd.s32 %s80, 1
    %p84 = scmp.eq.s32.totalorder %s11, 1
    %p85 = scmp.ne.s32.totalorder %s80, %s82
    %p86 = scmp.eq.s32.totalorder %s11, 0
    %p87 = por %p85, %p86
    %p88 = scmp.ne.s32.totalorder %s80, %s82
    %p89 = scmp.eq.s32.totalorder %s16, 1
    %p90 = por %p88, %p89
    %p91 = scmp.ne.s32.totalorder %s82, %s83
    %p92 = scmp.eq.s32.totalorder %s16, 0
    %p93 = por %p91, %p92
    %p94 = scmp.ne.s32.totalorder %s82, %s83
    %p95 = scmp.eq.s32.totalorder %s17, 1
    %p96 = por %p94, %p95
    %p98 = scmp.ne.s32.totalorder %s83, %s97
    %p99 = scmp.eq.s32.totalorder %s17, 0
    %p100 = por %p98, %p99
    %s102 = sadd.s32 %s101, 1
    %p105 = scmp.eq.s32.totalorder %s11, 1
    %p106 = scmp.ne.s32.totalorder %s101, %s103
    %p107 = scmp.eq.s32.totalorder %s11, 0
    %p108 = por %p106, %p107
    %p109 = scmp.ne.s32.totalorder %s101, %s103
    %p110 = scmp.eq.s32.totalorder %s16, 1
    %p111 = por %p109, %p110
    %p112 = scmp.ne.s32.totalorder %s103, %s104
    %p113 = scmp.eq.s32.totalorder %s16, 0
    %p114 = por %p112, %p113
    %p115 = scmp.ne.s32.totalorder %s103, %s104
    %p116 = scmp.eq.s32.totalorder %s17, 1
    %p117 = por %p115, %p116
    %p119 = scmp.ne.s32.totalorder %s104, %s118
    %p120 = scmp.eq.s32.totalorder %s17, 0
    %p121 = por %p119, %p120
    %s123 = sadd.s32 %s122, 1
    %p126 = scmp.eq.s32.totalorder %s11, 1
    %p127 = scmp.ne.s32.totalorder %s122, %s124
    %p128 = scmp.eq.s32.totalorder %s11, 0
    %p129 = por %p127, %p128
    %p130 = scmp.ne.s32.totalorder %s122, %s124
    %p131 = scmp.eq.s32.totalorder %s16, 1
    %p132 = por %p130, %p131
    %p133 = scmp.ne.s32.totalorder %s124, %s125
    %p134 = scmp.eq.s32.totalorder %s16, 0
    %p135 = por %p133, %p134
    %p136 = scmp.ne.s32.totalorder %s124, %s125
    %p137 = scmp.eq.s32.totalorder %s17, 1
    %p138 = por %p136, %p137
    %p140 = scmp.ne.s32.totalorder %s125, %s139
    %p141 = scmp.eq.s32.totalorder %s17, 0
    %p142 = por %p140, %p141
    %s143 = ssub.s32 %s18, %s30
    %s144 = ssub.s32 %s19, %s26
    %s145 = sor.u32 %s143, %s144
    %p146 = scmp.eq.s32.totalorder %s145, 0
    %s148 = sadd.s32 %s147, 1
    %s149 = scalar_select %p146, %s147, %s148
    %p152 = pneg %p146
    %p153 = scmp.eq.s32.totalorder %s11, 1
    %p154 = por %p152, %p153
    %p155 = scmp.ne.s32.totalorder %s147, %s150
    %p156 = scmp.eq.s32.totalorder %s11, 0
    %p157 = por %p155, %p156
    %p158 = scmp.ne.s32.totalorder %s147, %s150
    %p159 = scmp.eq.s32.totalorder %s16, 1
    %p160 = por %p158, %p159
    %p161 = scmp.ne.s32.totalorder %s150, %s151
    %p162 = scmp.eq.s32.totalorder %s16, 0
    %p163 = por %p161, %p162
    %p164 = scmp.ne.s32.totalorder %s150, %s151
    %p165 = scmp.eq.s32.totalorder %s17, 1
    %p166 = por %p164, %p165
    %p168 = scmp.ne.s32.totalorder %s151, %s167
    %p169 = scmp.eq.s32.totalorder %s17, 0
    %p170 = por %p168, %p169
    %p171 = scmp.le.s32.totalorder 1, %s11
    %p172 = scmp.lt.s32.totalorder %s11, 3
    %p173 = pnand %p171, %p172
    %p174 = pneg %p173
    // Predicated region
    $region9: #{tpu_custom_call.1} parent=5 // pred_check
      _
    $region10: #{tpu_custom_call.1} parent=5 // pred_check_branch
      %176 = sbr.rel (%p173) target = $region12
    $region11: #{tpu_custom_call.1} parent=5 // pred_region
      %s177 = ssub.s32 %s11, 1
      // Predicated region
      $region13: #{tpu_custom_call.1} parent=11 // pred_check
        %p178 = pneg %p72
      $region14: #{tpu_custom_call.1} parent=11 // pred_check_branch
        %180 = sbr.rel (%p178) target = $region16
      $region15: #{tpu_custom_call.1} parent=11 // pred_region
        _
      $region16: #{tpu_custom_call.1} parent=11 // pred_fallthru
        _
      // Predicated region
      $region17: #{tpu_custom_call.1} parent=11 // pred_check
        %p181 = pneg %p93
      $region18: #{tpu_custom_call.1} parent=11 // pred_check_branch
        %183 = sbr.rel (%p181) target = $region20
      $region19: #{tpu_custom_call.1} parent=11 // pred_region
        _
      $region20: #{tpu_custom_call.1} parent=11 // pred_fallthru
        _
      // Predicated region
      $region21: #{tpu_custom_call.1} parent=11 // pred_check
        %p184 = pneg %p114
      $region22: #{tpu_custom_call.1} parent=11 // pred_check_branch
        %186 = sbr.rel (%p184) target = $region24
      $region23: #{tpu_custom_call.1} parent=11 // pred_region
        _
      $region24: #{tpu_custom_call.1} parent=11 // pred_fallthru
        _
      // Predicated region
      $region25: #{tpu_custom_call.1} parent=11 // pred_check
        %p187 = pneg %p135
      $region26: #{tpu_custom_call.1} parent=11 // pred_check_branch
        %189 = sbr.rel (%p187) target = $region28
      $region27: #{tpu_custom_call.1} parent=11 // pred_region
        _
      $region28: #{tpu_custom_call.1} parent=11 // pred_fallthru
        _
    $region12: #{tpu_custom_call.1} parent=5 // pred_fallthru
      _
    %p190 = scmp.lt.s32.totalorder %s11, 2
    // Predicated region
    $region29: #{tpu_custom_call.1} parent=5 // pred_check
      %p191 = pneg %p190
    $region30: #{tpu_custom_call.1} parent=5 // pred_check_branch
      %193 = sbr.rel (%p191) target = $region32
    $region31: #{tpu_custom_call.1} parent=5 // pred_region
      // Predicated region
      $region33: #{tpu_custom_call.1} parent=31 // pred_check
        %p194 = pneg %p45
      $region34: #{tpu_custom_call.1} parent=31 // pred_check_branch
        %196 = sbr.rel (%p194) target = $region36
      $region35: #{tpu_custom_call.1} parent=31 // pred_region
        %p197 = scmp.lt.s32.totalorder %s18, 1
        %s198 = scalar_select %p197, %s18, 1
        %p199 = scmp.lt.s32.totalorder %s19, 0
        %s200 = scalar_select %p199, %s19, 0
        %s201 = smul.addr %s198, 3
        %s202 = sadd.s32 %s200, %s201
        %s203 = smul.addr %s202, 8
        %s204 = scalar_lea.vmem %s0, %s203
      $region36: #{tpu_custom_call.1} parent=31 // pred_fallthru
        _
    $region32: #{tpu_custom_call.1} parent=5 // pred_fallthru
      _
    %p205 = scmp.le.s32.totalorder 1, %s11
    %p206 = scmp.lt.s32.totalorder %s11, 3
    %p207 = pnand %p205, %p206
    %p208 = pneg %p207
    // Predicated region
    $region37: #{tpu_custom_call.1} parent=5 // pred_check
      _
    $region38: #{tpu_custom_call.1} parent=5 // pred_check_branch
      %210 = sbr.rel (%p207) target = $region40
    $region39: #{tpu_custom_call.1} parent=5 // pred_region
      %s211 = ssub.s32 %s11, 1
      %p212 = scmp.lt.s32.totalorder %s20, 1
      %s213 = scalar_select %p212, %s20, 1
      %p214 = scmp.lt.s32.totalorder %s21, 0
      %s215 = scalar_select %p214, %s21, 0
      %s216 = smul.addr %s213, 3
      %s217 = sadd.s32 %s215, %s216
      %s218 = smul.addr %s217, 8
      %s219 = scalar_lea.vmem %s0, %s218
      %p220 = pneg %p51
      %p221 = pneg %p48
      %p222 = pneg %p72
      %p223 = pneg %p69
      %p224 = pneg %p93
      %p225 = pneg %p90
      %p226 = pneg %p114
      %p227 = pneg %p111
      %p228 = pneg %p135
      %p229 = pneg %p132
      %p230 = pneg %p163
      %p231 = pneg %p160
      %p232 = scmp.lt.s32.totalorder %s20, 1
      %s233 = scalar_select %p232, %s20, 1
      %p234 = scmp.lt.s32.totalorder %s21, 0
      %s235 = scalar_select %p234, %s21, 0
      %s236 = smul.addr %s233, 3
      %s237 = sadd.s32 %s235, %s236
      %s238 = smul.addr %s237, 8
      %s239 = scalar_lea.vmem %s5, %s238
      %p240 = scmp.lt.s32.totalorder %s20, 1
      %s241 = scalar_select %p240, %s20, 1
      %p242 = scmp.lt.s32.totalorder %s21, 0
      %s243 = scalar_select %p242, %s21, 0
      %s244 = smul.addr %s241, 3
      %s245 = sadd.s32 %s243, %s244
      %s246 = smul.addr %s245, 8
      %s247 = scalar_lea.vmem %s0, %s246
      %p248 = scmp.lt.s32.totalorder %s20, 1
      %s249 = scalar_select %p248, %s20, 1
      %p250 = scmp.lt.s32.totalorder %s21, 0
      %s251 = scalar_select %p250, %s21, 0
      %s252 = smul.addr %s249, 3
      %s253 = sadd.s32 %s251, %s252
      %s254 = smul.addr %s253, 8
      %s255 = scalar_lea.vmem %s5, %s254
      %v256 = vld [vmem:[%s247] sm:$0xff]
      %v257 = vld [vmem:[%s247 + $0x8] sm:$0xff]
      %v258 = vld [vmem:[%s247 + $0x10] sm:$0x3]
      %v259 = vld [vmem:[%s1] sm:$0xff]
      %v260 = vld [vmem:[%s1 + $0x8] sm:$0xff]
      %v261 = vld [vmem:[%s1 + $0x10] sm:$0x3]
      %v262 = vld [vmem:[%s3] sm:$0xff]
      %v263 = vld [vmem:[%s3 + $0x8] sm:$0x1]
      %v264 = vld [vmem:[%s4] sm:$0xff]
      %v265 = vld [vmem:[%s4 + $0x8] sm:$0x1]
      %vm266 = vcmask 64512
      %v267 = vsel %vm266, %v256, 0.0
      %vm268 = vcmask 57344
      %v269 = vsel %vm268, %v257, 0.0
      %v270 = vadd.f32 %v267, %v269
      %v271 = vrot.slane %v270, 4
      %v272 = vadd.f32 %v270, %v271
      %v273 = vrot.slane %v272, 2
      %v274 = vadd.f32 %v272, %v273
      %v275 = vrot.slane %v274, 1
      %v276 = vadd.f32 %v274, %v275
      %v277 = vrcp.pop 9.0
      %v278 = vmul.f32 %v276, %v277
      %v279 = vsub.f32 %v256, %v278
      %v280 = vsub.f32 %v257, %v278
      %v281 = vmul.f32 %v279, %v279
      %v282 = vmul.f32 %v280, %v280
      %v283 = vsel %vm266, %v281, 0.0
      %v284 = vsel %vm268, %v282, 0.0
      %v285 = vadd.f32 %v283, %v284
      %v286 = vrot.slane %v285, 4
      %v287 = vadd.f32 %v285, %v286
      %v288 = vrot.slane %v287, 2
      %v289 = vadd.f32 %v287, %v288
      %v290 = vrot.slane %v289, 1
      %v291 = vadd.f32 %v289, %v290
      %v292 = vmul.f32 %v291, %v277
      %v293 = vadd.f32 %v292, 1e-06
      %v294 = vrsqrt.pop %v293
      %v295 = vmul.f32 %v279, %v294
      %v296 = vmul.f32 %v280, %v294
      %298 = vset.pattern.permute.xlu0 0
      %299 = vperm.xlu0 %298, %v262
      %v300 = vpop.permute.xlu0 %299
      %303 = vset.pattern.permute.xlu0 0
      %304 = vperm.xlu0 %303, %v263
      %v305 = vpop.permute.xlu0 %304
      %v307 = vmul.f32 %v295, %v300
      %v308 = vmul.f32 %v296, %v305
      %310 = vset.pattern.permute.xlu0 0
      %311 = vperm.xlu0 %310, %v264
      %v312 = vpop.permute.xlu0 %311
      %315 = vset.pattern.permute.xlu0 0
      %316 = vperm.xlu0 %315, %v265
      %v317 = vpop.permute.xlu0 %316
      %v319 = vadd.f32 %v307, %v312
      %v320 = vadd.f32 %v308, %v317
      %vm323 = vcmask 1046528
      %v324 = vrot.slane %v257, 1
      %v325 = vrot.slane %v258, 1
      %v326 = vsel %vm323, %v324, %v325
      %v329 = vsel %vm266, %v326, 0.0
      %v330 = vsel %vm268, %v325, 0.0
      %v331 = vadd.f32 %v329, %v330
      %v332 = vrot.slane %v331, 4
      %v333 = vadd.f32 %v331, %v332
      %v334 = vrot.slane %v333, 2
      %v335 = vadd.f32 %v333, %v334
      %v336 = vrot.slane %v335, 1
      %v337 = vadd.f32 %v335, %v336
      %v338 = vmul.f32 %v337, %v277
      %v339 = vsub.f32 %v257, %v338
      %v340 = vsub.f32 %v258, %v338
      %v341 = vmul.f32 %v339, %v339
      %v342 = vmul.f32 %v340, %v340
      %v345 = vrot.slane %v341, 1
      %v346 = vrot.slane %v342, 1
      %v347 = vsel %vm323, %v345, %v346
      %v350 = vsel %vm266, %v347, 0.0
      %v351 = vsel %vm268, %v346, 0.0
      %v352 = vadd.f32 %v350, %v351
      %v353 = vrot.slane %v352, 4
      %v354 = vadd.f32 %v352, %v353
      %v355 = vrot.slane %v354, 2
      %v356 = vadd.f32 %v354, %v355
      %v357 = vrot.slane %v356, 1
      %v358 = vadd.f32 %v356, %v357
      %v359 = vmul.f32 %v358, %v277
      %v360 = vadd.f32 %v359, 1e-06
      %v361 = vrsqrt.pop %v360
      %v362 = vmul.f32 %v339, %v361
      %v363 = vmul.f32 %v340, %v361
      %vm364 = vcmask 1040384
      %v365 = vrot.slane %v300, 7
      %v366 = vrot.slane %v305, 7
      %v367 = vsel %vm364, %v365, %v366
      %v370 = vmul.f32 %v362, %v365
      %v371 = vmul.f32 %v363, %v367
      %v372 = vrot.slane %v312, 7
      %v373 = vrot.slane %v317, 7
      %v374 = vsel %vm364, %v372, %v373
      %v377 = vadd.f32 %v370, %v372
      %v378 = vadd.f32 %v371, %v374
      %382 = vrot.lane.b32.xlu0 %v259, 119
      %v383 = vpop.permute.xlu0 %382
      %384 = vrot.lane.b32.xlu0 %v260, 119
      %v385 = vpop.permute.xlu0 %384
      %386 = vrot.lane.b32.xlu0 %v261, 119
      %v387 = vpop.permute.xlu0 %386
      %v390 = vrot.slane %v377, 1
      %v391 = vrot.slane %v378, 1
      %v392 = vsel %vm323, %v390, %v391
      %vm394 = vcmask 72704
      %v395 = vsel %vm394, %v383, 0
      %v397 = vsel %vm394, %v385, 0
      %v399 = vsel %vm394, %v387, 0
      %v401 = vsel %vm364, %v391, 0
      %403 = vmatprep.subr.mxu0 0.0
      %404 = vmatpush1.msra.mxu0 %v392
      %405 = vmatprep.subr.mxu0 0.0
      %406 = vmatpush1.msra.mxu0 %v401
      %407 = vmatprep.subr.mxu0 0.0
      %408 = vmatpush1.msra.mxu0 0.0
      %409 = vmatprep.subr.mxu0 0.0
      %410 = vmatpush1.msra.mxu0 0.0
      %411 = vmatprep.subr.mxu0 0.0
      %412 = vmatpush1.msra.mxu0 0.0
      %413 = vmatprep.subr.mxu0 0.0
      %414 = vmatpush1.msra.mxu0 0.0
      %415 = vmatprep.subr.mxu0 0.0
      %416 = vmatpush1.msra.mxu0 0.0
      %417 = vmatprep.subr.mxu0 0.0
      %418 = vmatpush1.msra.mxu0 0.0
      %419 = vmatprep.subr.mxu0 0.0
      %420 = vmatpush1.msra.mxu0 0.0
      %421 = vmatprep.subr.mxu0 0.0
      %422 = vmatpush1.msra.mxu0 0.0
      %423 = vmatprep.subr.mxu0 0.0
      %424 = vmatpush1.msra.mxu0 0.0
      %425 = vmatprep.subr.mxu0 0.0
      %426 = vmatpush1.msra.mxu0 0.0
      %427 = vmatprep.subr.mxu0 0.0
      %428 = vmatpush1.msra.mxu0 0.0
      %429 = vmatprep.subr.mxu0 0.0
      %430 = vmatpush1.msra.mxu0 0.0
      %431 = vmatprep.subr.mxu0 0.0
      %432 = vmatpush1.msra.mxu0 0.0
      %433 = vmatprep.subr.mxu0 0.0
      %434 = vmatpush1.msra.mxu0 0.0
      %435 = vmatprep.subr.mxu0 0.0
      %436 = vmatpush1.msra.mxu0 0.0
      %437 = vmatprep.subr.mxu0 0.0
      %438 = vmatpush1.msra.mxu0 0.0
      %439 = vmatprep.subr.mxu0 0.0
      %440 = vmatpush1.msra.mxu0 0.0
      %441 = vmatprep.subr.mxu0 0.0
      %442 = vmatpush1.msra.mxu0 0.0
      %443 = vmatprep.subr.mxu0 0.0
      %444 = vmatpush1.msra.mxu0 0.0
      %445 = vmatprep.subr.mxu0 0.0
      %446 = vmatpush1.msra.mxu0 0.0
      %447 = vmatprep.subr.mxu0 0.0
      %448 = vmatpush1.msra.mxu0 0.0
      %449 = vmatprep.subr.mxu0 0.0
      %450 = vmatpush1.msra.mxu0 0.0
      %451 = vmatprep.subr.mxu0 0.0
      %452 = vmatpush1.msra.mxu0 0.0
      %453 = vmatprep.subr.mxu0 0.0
      %454 = vmatpush1.msra.mxu0 0.0
      %455 = vmatprep.subr.mxu0 0.0
      %456 = vmatpush1.msra.mxu0 0.0
      %457 = vmatprep.subr.mxu0 0.0
      %458 = vmatpush1.msra.mxu0 0.0
      %459 = vmatprep.subr.mxu0 0.0
      %460 = vmatpush1.msra.mxu0 0.0
      %461 = vmatprep.subr.mxu0 0.0
      %462 = vmatpush1.msra.mxu0 0.0
      %463 = vmatprep.subr.mxu0 0.0
      %464 = vmatpush1.msra.mxu0 0.0
      %465 = vmatprep.subr.mxu0 0.0
      %466 = vmatpush1.msra.mxu0 0.0
      %467 = vmatprep.mubr.f32.mxu0 0.0
      %468 = vmatmul.mubr.f32.gmra.mrb[0].mxu0 %v395
      %v469 = vpop.f32.mrb[0].mxu0
      %v470 = vadd.f32 0.0, %v469
      %v471 = vpop.f32.mrb[0].mxu0
      %472 = vmatprep.mubr.f32.mxu0 0.0
      %473 = vmatmul.mubr.f32.gmra.mrb[0].mxu0 %v397
      %v474 = vpop.f32.mrb[0].mxu0
      %v475 = vadd.f32 0.0, %v474
      %v476 = vpop.f32.mrb[0].mxu0
      %477 = vmatprep.mubr.f32.mxu0 0.0
      %478 = vmatmul.mubr.f32.gmra.mrb[0].mxu0 %v399
      %v479 = vpop.f32.mrb[0].mxu0
      %v480 = vadd.f32 0.0, %v479
      %v481 = vpop.f32.mrb[0].mxu0
      %482 = vdwg.mxu0
      %v483 = vsel %vm394, %v259, 0
      %v485 = vsel %vm394, %v260, 0
      %v487 = vsel %vm394, %v261, 0
      %v490 = vsel %vm364, %v320, 0
      %492 = vmatprep.subr.mxu0 0.0
      %493 = vmatpush1.msra.mxu0 %v319
      %494 = vmatprep.subr.mxu0 0.0
      %495 = vmatpush1.msra.mxu0 %v490
      %496 = vmatprep.subr.mxu0 0.0
      %497 = vmatpush1.msra.mxu0 0.0
      %498 = vmatprep.subr.mxu0 0.0
      %499 = vmatpush1.msra.mxu0 0.0
      %500 = vmatprep.subr.mxu0 0.0
      %501 = vmatpush1.msra.mxu0 0.0
      %502 = vmatprep.subr.mxu0 0.0
      %503 = vmatpush1.msra.mxu0 0.0
      %504 = vmatprep.subr.mxu0 0.0
      %505 = vmatpush1.msra.mxu0 0.0
      %506 = vmatprep.subr.mxu0 0.0
      %507 = vmatpush1.msra.mxu0 0.0
      %508 = vmatprep.subr.mxu0 0.0
      %509 = vmatpush1.msra.mxu0 0.0
      %510 = vmatprep.subr.mxu0 0.0
      %511 = vmatpush1.msra.mxu0 0.0
      %512 = vmatprep.subr.mxu0 0.0
      %513 = vmatpush1.msra.mxu0 0.0
      %514 = vmatprep.subr.mxu0 0.0
      %515 = vmatpush1.msra.mxu0 0.0
      %516 = vmatprep.subr.mxu0 0.0
      %517 = vmatpush1.msra.mxu0 0.0
      %518 = vmatprep.subr.mxu0 0.0
      %519 = vmatpush1.msra.mxu0 0.0
      %520 = vmatprep.subr.mxu0 0.0
      %521 = vmatpush1.msra.mxu0 0.0
      %522 = vmatprep.subr.mxu0 0.0
      %523 = vmatpush1.msra.mxu0 0.0
      %524 = vmatprep.subr.mxu0 0.0
      %525 = vmatpush1.msra.mxu0 0.0
      %526 = vmatprep.subr.mxu0 0.0
      %527 = vmatpush1.msra.mxu0 0.0
      %528 = vmatprep.subr.mxu0 0.0
      %529 = vmatpush1.msra.mxu0 0.0
      %530 = vmatprep.subr.mxu0 0.0
      %531 = vmatpush1.msra.mxu0 0.0
      %532 = vmatprep.subr.mxu0 0.0
      %533 = vmatpush1.msra.mxu0 0.0
      %534 = vmatprep.subr.mxu0 0.0
      %535 = vmatpush1.msra.mxu0 0.0
      %536 = vmatprep.subr.mxu0 0.0
      %537 = vmatpush1.msra.mxu0 0.0
      %538 = vmatprep.subr.mxu0 0.0
      %539 = vmatpush1.msra.mxu0 0.0
      %540 = vmatprep.subr.mxu0 0.0
      %541 = vmatpush1.msra.mxu0 0.0
      %542 = vmatprep.subr.mxu0 0.0
      %543 = vmatpush1.msra.mxu0 0.0
      %544 = vmatprep.subr.mxu0 0.0
      %545 = vmatpush1.msra.mxu0 0.0
      %546 = vmatprep.subr.mxu0 0.0
      %547 = vmatpush1.msra.mxu0 0.0
      %548 = vmatprep.subr.mxu0 0.0
      %549 = vmatpush1.msra.mxu0 0.0
      %550 = vmatprep.subr.mxu0 0.0
      %551 = vmatpush1.msra.mxu0 0.0
      %552 = vmatprep.subr.mxu0 0.0
      %553 = vmatpush1.msra.mxu0 0.0
      %554 = vmatprep.subr.mxu0 0.0
      %555 = vmatpush1.msra.mxu0 0.0
      %556 = vmatprep.mubr.f32.mxu0 0.0
      %557 = vmatmul.mubr.f32.gmra.mrb[0].mxu0 %v483
      %v558 = vpop.f32.mrb[0].mxu0
      %v559 = vadd.f32 %v470, %v558
      %v560 = vpop.f32.mrb[0].mxu0
      %561 = vmatprep.mubr.f32.mxu0 0.0
      %562 = vmatmul.mubr.f32.gmra.mrb[0].mxu0 %v485
      %v563 = vpop.f32.mrb[0].mxu0
      %v564 = vadd.f32 %v475, %v563
      %v565 = vpop.f32.mrb[0].mxu0
      %566 = vmatprep.mubr.f32.mxu0 0.0
      %567 = vmatmul.mubr.f32.gmra.mrb[0].mxu0 %v487
      %v568 = vpop.f32.mrb[0].mxu0
      %v569 = vadd.f32 %v480, %v568
      %v570 = vpop.f32.mrb[0].mxu0
      %571 = vdwg.mxu0
      %v572 = vld [vmem:[%s2] sm:$0xff]
      %v573 = vld [vmem:[%s2 + $0x8] sm:$0xff]
      %v574 = vld [vmem:[%s2 + $0x10] sm:$0x3]
      %576 = vset.pattern.permute.xlu0 0
      %577 = vperm.xlu0 %576, %v572
      %v578 = vpop.permute.xlu0 %577
      %581 = vset.pattern.permute.xlu0 0
      %582 = vperm.xlu0 %581, %v573
      %v583 = vpop.permute.xlu0 %582
      %586 = vset.pattern.permute.xlu0 0
      %587 = vperm.xlu0 %586, %v574
      %v588 = vpop.permute.xlu0 %587
      %v590 = vadd.f32 %v559, %v578
      %v591 = vadd.f32 %v564, %v583
      %v592 = vadd.f32 %v569, %v588
      %593 = vst.msk [vmem:[%s255] sm:$0xff] %vm266, %v590
      %594 = vst.msk [vmem:[%s255 + $0x8] sm:$0xff] %vm266, %v591
      %vm595 = vcmask 58368
      %596 = vst.msk [vmem:[%s255 + $0x10] sm:$0x3] %vm595, %v592
      %p597 = scmp.lt.s32.totalorder %s20, 1
      %s598 = scalar_select %p597, %s20, 1
      %p599 = scmp.lt.s32.totalorder %s21, 0
      %s600 = scalar_select %p599, %s21, 0
      %s601 = smul.addr %s598, 3
      %s602 = sadd.s32 %s600, %s601
      %s603 = smul.addr %s602, 8
      %s604 = scalar_lea.vmem %s5, %s603
      // Predicated region
      $region41: #{tpu_custom_call.1} parent=39 // pred_check
        %p605 = pneg %p160
      $region42: #{tpu_custom_call.1} parent=39 // pred_check_branch
        %607 = sbr.rel (%p605) target = $region44
      $region43: #{tpu_custom_call.1} parent=39 // pred_region
        _
      $region44: #{tpu_custom_call.1} parent=39 // pred_fallthru
        _
    $region40: #{tpu_custom_call.1} parent=5 // pred_fallthru
      _
    %p608 = scmp.le.s32.totalorder 2, %s11
    // Predicated region
    $region45: #{tpu_custom_call.1} parent=5 // pred_check
      %p609 = pneg %p608
    $region46: #{tpu_custom_call.1} parent=5 // pred_check_branch
      %611 = sbr.rel (%p609) target = $region48
    $region47: #{tpu_custom_call.1} parent=5 // pred_region
      %s612 = ssub.s32 %s11, 2
      // Predicated region
      $region49: #{tpu_custom_call.1} parent=47 // pred_check
        %p613 = pneg %p166
      $region50: #{tpu_custom_call.1} parent=47 // pred_check_branch
        %615 = sbr.rel (%p613) target = $region52
      $region51: #{tpu_custom_call.1} parent=47 // pred_region
        %p616 = scmp.lt.s32.totalorder %s22, 1
        %s617 = scalar_select %p616, %s22, 1
        %p618 = scmp.lt.s32.totalorder %s23, 0
        %s619 = scalar_select %p618, %s23, 0
        %s620 = smul.addr %s617, 3
        %s621 = sadd.s32 %s619, %s620
        %s622 = smul.addr %s621, 8
        %s623 = scalar_lea.vmem %s5, %s622
      $region52: #{tpu_custom_call.1} parent=47 // pred_fallthru
        _
    $region48: #{tpu_custom_call.1} parent=5 // pred_fallthru
      _
  $region6: #{tpu_custom_call.1} parent=0 // loop_footer
    %s15 = sadd.s32 1, %s11
  $region7: #{tpu_custom_call.1} parent=0 // loop_footer_branch
    %10 = sbr.rel target = $region3
  $region8: #{tpu_custom_call.1} parent=0 // loop_exit
    _

</llo_original>
